<compile_context>
chip_gen: v7x
topology: tpu7x:2x2x1
jax: 0.10.0
libtpu: 0.0.40
codegen_flags: <defaults>
</compile_context>

<pallas_src>
import functools

import jax
import jax.numpy as jnp
from jax.experimental import pallas as pl
from jax.experimental.pallas import tpu as pltpu


def _round_up(n, m):
    return ((n + m - 1) // m) * m


def _ssm_kernel(x_ref, w1_ref, b1_ref, w2_ref, b2_ref, o_ref):
    """out = silu(x @ W1 + b1) @ W2 + b2 for one (tm, F) row tile."""
    # MXU matmul with f32 accumulation; feed the native (f32/bf16) dtype.
    h = jnp.dot(x_ref[...], w1_ref[...], preferred_element_type=jnp.float32)
    h = h + b1_ref[...].astype(jnp.float32)
    # SiLU in f32; sigmoid lowers to the EUP slot (free vs. VALU/MXU).
    s = h * jax.nn.sigmoid(h)
    # Cast the state to the weight dtype so a bf16 weight path stays bf16 on
    # the MXU for the second matmul as well.
    s = s.astype(w2_ref.dtype)
    o = jnp.dot(s, w2_ref[...], preferred_element_type=jnp.float32)
    o = o + b2_ref[...].astype(jnp.float32)
    o_ref[...] = o.astype(o_ref.dtype)


@functools.partial(jax.jit, static_argnames=("tm",))
def selective_ssm(x, w1, b1, w2, b2, *, tm=512):
    """x: (B, S, F) -> (B, S, F) == linear2(silu(linear1(x))).

    Weights: w1 (F, D), w2 (D, F)  (transposed vs. PyTorch); biases (1, out).
    """
    B, S, F = x.shape
    D = w1.shape[1]
    M = B * S

    # --- Row tiling -------------------------------------------------------
    # Keep the number of grid steps implied by the requested tile, but balance
    # the tile size so padding is at most 7 rows (sublane alignment), instead
    # of padding the ragged tail up to a full tile.
    M8 = _round_up(M, 8)
    n_tiles = -(-M8 // tm)                       # ceil
    tm_eff = _round_up(-(-M8 // n_tiles), 8)     # balanced, 8-aligned, <= tm
    Mp = tm_eff * n_tiles

    x2d = x.reshape(M, F)
    if Mp != M:
        # Row-independent op: zero-pad tail rows, slice them off afterwards.
        x2d = jnp.pad(x2d, ((0, Mp - M), (0, 0)))

    # --- VMEM budget --------------------------------------------------------
    # x/out row tiles are double-buffered by the pipeline; weights are
    # grid-invariant (fetched once) but we conservatively reserve double-buffer
    # space for them, plus room for the f32 intermediates.
    x_bytes = x.dtype.itemsize
    w_bytes = w1.dtype.itemsize
    est = (2 * 2 * tm_eff * F * x_bytes                     # x tile + out tile
           + 2 * (F * D + D * F + D + F) * w_bytes          # weights + biases
           + 3 * tm_eff * max(D, F) * 4)                    # f32 temporaries
    vmem_limit = int(min(max(4 * est, 16 << 20), 64 << 20))  # <= v7x physical

    # Advisory cost hint for the XLA scheduler around the custom call.
    cost = pl.CostEstimate(
        flops=2 * M * D * (F + F),               # two (M,F)x(F,D)-class matmuls
        transcendentals=M * D,                   # sigmoid
        bytes_accessed=(2 * M * F * x_bytes + 2 * F * D * w_bytes),
    )

    out2d = pl.pallas_call(
        _ssm_kernel,
        out_shape=jax.ShapeDtypeStruct((Mp, F), x.dtype),
        grid_spec=pl.GridSpec(
            grid=(n_tiles,),
            in_specs=[
                pl.BlockSpec((tm_eff, F), lambda i: (i, 0)),  # x row tile
                pl.BlockSpec((F, D), lambda i: (0, 0)),       # W1 (resident)
                pl.BlockSpec((1, D), lambda i: (0, 0)),       # b1
                pl.BlockSpec((D, F), lambda i: (0, 0)),       # W2 (resident)
                pl.BlockSpec((1, F), lambda i: (0, 0)),       # b2
            ],
            out_specs=pl.BlockSpec((tm_eff, F), lambda i: (i, 0)),
        ),
        compiler_params=pltpu.CompilerParams(
            # Row axis is independent -> shard grid steps across TCs on v7x.
            dimension_semantics=("parallel",),
            vmem_limit_bytes=vmem_limit,
        ),
        cost_estimate=cost,
    )(x2d, w1, b1, w2, b2)

    if Mp != M:
        out2d = out2d[:M]
    return out2d.reshape(B, S, F)


def _init_linear(key, fan_in, fan_out, dtype=jnp.float32):
    """nn.Linear-style init: U(-1/sqrt(fan_in), 1/sqrt(fan_in)).

    Weight returned as (fan_in, fan_out) (transposed vs. PyTorch), bias (1, fan_out).
    """
    kw, kb = jax.random.split(key)
    bound = 1.0 / jnp.sqrt(fan_in)
    w = jax.random.uniform(kw, (fan_in, fan_out), dtype, -bound, bound)
    b = jax.random.uniform(kb, (1, fan_out), dtype, -bound, bound)
    return w, b


def _reference(x, w1, b1, w2, b2):
    h = x @ w1 + b1[0]
    s = h * jax.nn.sigmoid(h)
    return s @ w2 + b2[0]


if __name__ == "__main__":
    # Small shapes consistent with the module: batch=2, seq=8, n_features=32, state_dim=64.
    N_FEATURES, STATE_DIM = 32, 64

    key = jax.random.PRNGKey(0)
    kx, k1, k2, kx2 = jax.random.split(key, 4)

    w1, b1 = _init_linear(k1, N_FEATURES, STATE_DIM)   # linear1: n_features -> state_dim
    w2, b2 = _init_linear(k2, STATE_DIM, N_FEATURES)   # linear2: state_dim -> n_features

    # Case 1: tiny input (B*S=16 < tm) -> tile clamps to the 8-aligned problem size.
    x = jax.random.normal(kx, (2, 8, N_FEATURES), dtype=jnp.float32)
    out = jax.block_until_ready(selective_ssm(x, w1, b1, w2, b2))
    ref = _reference(x, w1, b1, w2, b2)
    assert out.shape == x.shape
    assert jnp.allclose(out, ref, atol=1e-5, rtol=1e-5), "mismatch vs reference (small)"

    # Case 2: B*S not a multiple of the tile (3*100=300) -> balanced tiles + tail pad.
    x_big = jax.random.normal(kx2, (3, 100, N_FEATURES), dtype=jnp.float32)
    out_big = jax.block_until_ready(selective_ssm(x_big, w1, b1, w2, b2, tm=256))
    ref_big = _reference(x_big, w1, b1, w2, b2)
    assert out_big.shape == x_big.shape
    assert jnp.allclose(out_big, ref_big, atol=1e-5, rtol=1e-5), "mismatch vs reference (padded)"

    print("KERNEL_OK")
</pallas_src>

<mosaic_0001>
module attributes {stable_mosaic.version = 11 : i64} {
  func.func @_ssm_kernel(%arg0: i32, %arg1: memref<16x32xf32, #tpu.memory_space<vmem>>, %arg2: memref<32x64xf32, #tpu.memory_space<vmem>>, %arg3: memref<1x64xf32, #tpu.memory_space<vmem>>, %arg4: memref<64x32xf32, #tpu.memory_space<vmem>>, %arg5: memref<1x32xf32, #tpu.memory_space<vmem>>, %arg6: memref<16x32xf32, #tpu.memory_space<vmem>>) attributes {dimension_semantics = [#tpu.dimension_semantics<parallel>], iteration_bounds = array<i64: 1>, scalar_prefetch = 0 : i64, scratch_operands = 0 : i64, tpu.core_type = #tpu.core_type<tc>, window_params = [{transform_indices = @transform_0, window_bounds = array<i64: 16, 32>}, {pipeline_mode = #tpu.pipeline_mode<synchronous>, transform_indices = @transform_1, window_bounds = array<i64: 32, 64>}, {pipeline_mode = #tpu.pipeline_mode<synchronous>, transform_indices = @transform_2, window_bounds = array<i64: 1, 64>}, {pipeline_mode = #tpu.pipeline_mode<synchronous>, transform_indices = @transform_3, window_bounds = array<i64: 64, 32>}, {pipeline_mode = #tpu.pipeline_mode<synchronous>, transform_indices = @transform_4, window_bounds = array<i64: 1, 32>}, {transform_indices = @transform_5, window_bounds = array<i64: 16, 32>}]} {
    %c0 = arith.constant 0 : index
    %c0_0 = arith.constant 0 : index
    %0 = vector.load %arg1[%c0, %c0_0] : memref<16x32xf32, #tpu.memory_space<vmem>>, vector<16x32xf32>
    %c0_1 = arith.constant 0 : index
    %c0_2 = arith.constant 0 : index
    %1 = vector.load %arg2[%c0_1, %c0_2] : memref<32x64xf32, #tpu.memory_space<vmem>>, vector<32x64xf32>
    %cst = arith.constant dense<0.000000e+00> : vector<16x64xf32>
    %2 = tpu.matmul %0, %1, %cst {dimension_numbers = #tpu.dot_dimension_numbers<[1], [0], [0], [1], [0, 0, 1, 1], [], []>} : vector<16x32xf32>, vector<32x64xf32>, vector<16x64xf32> -> vector<16x64xf32>
    %c0_3 = arith.constant 0 : index
    %c0_4 = arith.constant 0 : index
    %3 = vector.load %arg3[%c0_3, %c0_4] : memref<1x64xf32, #tpu.memory_space<vmem>>, vector<1x64xf32>
    %4 = vector.broadcast %3 : vector<1x64xf32> to vector<16x64xf32>
    %5 = arith.addf %2, %4 : vector<16x64xf32>
    %6 = arith.negf %5 : vector<16x64xf32>
    %7 = math.exp %6 : vector<16x64xf32>
    %cst_5 = arith.constant 1.000000e+00 : f32
    %8 = vector.broadcast %cst_5 : f32 to vector<16x64xf32>
    %9 = arith.addf %8, %7 : vector<16x64xf32>
    %10 = arith.divf %8, %9 : vector<16x64xf32>
    %11 = arith.mulf %5, %10 : vector<16x64xf32>
    %c0_6 = arith.constant 0 : index
    %c0_7 = arith.constant 0 : index
    %12 = vector.load %arg4[%c0_6, %c0_7] : memref<64x32xf32, #tpu.memory_space<vmem>>, vector<64x32xf32>
    %cst_8 = arith.constant dense<0.000000e+00> : vector<16x32xf32>
    %13 = tpu.matmul %11, %12, %cst_8 {dimension_numbers = #tpu.dot_dimension_numbers<[1], [0], [0], [1], [0, 0, 1, 1], [], []>} : vector<16x64xf32>, vector<64x32xf32>, vector<16x32xf32> -> vector<16x32xf32>
    %c0_9 = arith.constant 0 : index
    %c0_10 = arith.constant 0 : index
    %14 = vector.load %arg5[%c0_9, %c0_10] : memref<1x32xf32, #tpu.memory_space<vmem>>, vector<1x32xf32>
    %15 = vector.broadcast %14 : vector<1x32xf32> to vector<16x32xf32>
    %16 = arith.addf %13, %15 : vector<16x32xf32>
    %c0_11 = arith.constant 0 : index
    %c0_12 = arith.constant 0 : index
    %17 = vector.load %arg6[%c0_11, %c0_12] : memref<16x32xf32, #tpu.memory_space<vmem>>, vector<16x32xf32>
    tpu.vector_store %arg6[%c0_11, %c0_12], %16 {strides = array<i32>} : memref<16x32xf32, #tpu.memory_space<vmem>>, vector<16x32xf32>,
    return
  }
  func.func @transform_0(%arg0: i32) -> (i32, i32) {
    %c0_i32 = arith.constant 0 : i32
    %c0_i32_0 = arith.constant 0 : i32
    return %arg0, %c0_i32 : i32, i32
  }
  func.func @transform_1(%arg0: i32) -> (i32, i32) {
    %c0_i32 = arith.constant 0 : i32
    %c0_i32_0 = arith.constant 0 : i32
    %c0_i32_1 = arith.constant 0 : i32
    return %c0_i32, %c0_i32_0 : i32, i32
  }
  func.func @transform_2(%arg0: i32) -> (i32, i32) {
    %c0_i32 = arith.constant 0 : i32
    %c0_i32_0 = arith.constant 0 : i32
    %c0_i32_1 = arith.constant 0 : i32
    return %c0_i32, %c0_i32_0 : i32, i32
  }
  func.func @transform_3(%arg0: i32) -> (i32, i32) {
    %c0_i32 = arith.constant 0 : i32
    %c0_i32_0 = arith.constant 0 : i32
    %c0_i32_1 = arith.constant 0 : i32
    return %c0_i32, %c0_i32_0 : i32, i32
  }
  func.func @transform_4(%arg0: i32) -> (i32, i32) {
    %c0_i32 = arith.constant 0 : i32
    %c0_i32_0 = arith.constant 0 : i32
    %c0_i32_1 = arith.constant 0 : i32
    return %c0_i32, %c0_i32_0 : i32, i32
  }
  func.func @transform_5(%arg0: i32) -> (i32, i32) {
    %c0_i32 = arith.constant 0 : i32
    %c0_i32_0 = arith.constant 0 : i32
    return %arg0, %c0_i32 : i32, i32
  }
}

</mosaic_0001>

<llo_original>
// kernel: selective_ssm.1
$region0: #{selective_ssm.1}
  #allocation0 [shape = 'u32[]', space=smem, size = 0x4, offset = 0x4, fixed_abs, tag = 'smem constant byte address 0x4 - core index']
  #allocation1 [shape = 'u32[144,128]{1,0:T(1,128)}', space=vmem, size = 0x12000, scoped, tag = 'internal scratch']
  %s0 = inlined_call_operand.vmem [shape: f32[16,32], index: 0, kind: input, shape index: {}]
  %s1 = inlined_call_operand.vmem [shape: f32[32,64], index: 1, kind: input, shape index: {}]
  %s2 = inlined_call_operand.vmem [shape: f32[1,64], index: 2, kind: input, shape index: {}]
  %s3 = inlined_call_operand.vmem [shape: f32[64,32], index: 3, kind: input, shape index: {}]
  %s4 = inlined_call_operand.vmem [shape: f32[1,32], index: 4, kind: input, shape index: {}]
  %s5 = inlined_call_operand.hbm [shape: f32[16,32], index: 5, kind: output, shape index: {}]
  %s6 = sld [smem:[#allocation0]]
  $region30: #{selective_ssm.1} parent=0
    _
  %s8 = ssub.s32 1, %s6
  %s9 = scalar_select 0, %s8, %s6
  $region1: #{selective_ssm.1} parent=0
    #allocation2 [shape = 'u8[8192]{0}', space=vmem, size = 0x2000, scoped, tag = 'output window, operand 0, single buffered']
    #allocation3 [shape = 's32[1]{0}', space=sflag, size = 0x4, scoped, tag = 'scoped memory for selective_ssm.1']
    %10 = vsyncpa [#allocation3], 0
    // Predicated region
    $region2: #{selective_ssm.1} parent=1 // pred_check
      _
    $region3: #{selective_ssm.1} parent=1 // pred_check_branch
      %12 = sbr.rel (0) target = $region5
    $region4: #{selective_ssm.1} parent=1 // pred_region
      _
    $region5: #{selective_ssm.1} parent=1 // pred_fallthru
      _
    // Predicated region
    $region6: #{selective_ssm.1} parent=1 // pred_check
      _
    $region7: #{selective_ssm.1} parent=1 // pred_check_branch
      %14 = sbr.rel (0) target = $region9
    $region8: #{selective_ssm.1} parent=1 // pred_region
      _
    $region9: #{selective_ssm.1} parent=1 // pred_fallthru
      _
    // Predicated region
    $region10: #{selective_ssm.1} parent=1 // pred_check
      _
    $region11: #{selective_ssm.1} parent=1 // pred_check_branch
      %16 = sbr.rel (0) target = $region13
    $region12: #{selective_ssm.1} parent=1 // pred_region
      _
    $region13: #{selective_ssm.1} parent=1 // pred_fallthru
      _
    // Predicated region
    $region14: #{selective_ssm.1} parent=1 // pred_check
      _
    $region15: #{selective_ssm.1} parent=1 // pred_check_branch
      %18 = sbr.rel (0) target = $region17
    $region16: #{selective_ssm.1} parent=1 // pred_region
      _
    $region17: #{selective_ssm.1} parent=1 // pred_fallthru
      _
    // Predicated region
    $region18: #{selective_ssm.1} parent=1 // pred_check
      _
    $region19: #{selective_ssm.1} parent=1 // pred_check_branch
      %20 = sbr.rel (0) target = $region21
    $region20: #{selective_ssm.1} parent=1 // pred_region
      _
    $region21: #{selective_ssm.1} parent=1 // pred_fallthru
      _
    %v21 = vld [vmem:[%s0] sm:$0xff]
    %v22 = vld [vmem:[%s0 + $0x8] sm:$0xff]
    %v23 = vld [vmem:[%s1] sm:$0xff]
    %v24 = vld [vmem:[%s1 + $0x8] sm:$0xff]
    %v25 = vld [vmem:[%s1 + $0x10] sm:$0xff]
    %v26 = vld [vmem:[%s1 + $0x18] sm:$0xff]
    %v27 = vld [vmem:[%s2] sm:$0x1]
    %v29 = vlaneseq
    %v30 = vshrl.u32 %v29, 7
    %v31 = vsub.s32 0, %v30
    %v32 = vrot.slane %v27, %v31
    %vm34 = vcmask 261120
    %v36 = vsel %vm34, %v21, 0
    %v39 = vsel %vm34, %v22, 0
    %41 = vmatprep.subr.mxu0 0.0
    %42 = vmatpush1.msra.mxu0 %v23
    %43 = vmatprep.subr.mxu0 0.0
    %44 = vmatpush1.msra.mxu0 %v24
    %45 = vmatprep.subr.mxu0 0.0
    %46 = vmatpush1.msra.mxu0 %v25
    %47 = vmatprep.subr.mxu0 0.0
    %48 = vmatpush1.msra.mxu0 %v26
    %49 = vmatprep.subr.mxu0 0.0
    %50 = vmatpush1.msra.mxu0 0.0
    %51 = vmatprep.subr.mxu0 0.0
    %52 = vmatpush1.msra.mxu0 0.0
    %53 = vmatprep.subr.mxu0 0.0
    %54 = vmatpush1.msra.mxu0 0.0
    %55 = vmatprep.subr.mxu0 0.0
    %56 = vmatpush1.msra.mxu0 0.0
    %57 = vmatprep.subr.mxu0 0.0
    %58 = vmatpush1.msra.mxu0 0.0
    %59 = vmatprep.subr.mxu0 0.0
    %60 = vmatpush1.msra.mxu0 0.0
    %61 = vmatprep.subr.mxu0 0.0
    %62 = vmatpush1.msra.mxu0 0.0
    %63 = vmatprep.subr.mxu0 0.0
    %64 = vmatpush1.msra.mxu0 0.0
    %65 = vmatprep.subr.mxu0 0.0
    %66 = vmatpush1.msra.mxu0 0.0
    %67 = vmatprep.subr.mxu0 0.0
    %68 = vmatpush1.msra.mxu0 0.0
    %69 = vmatprep.subr.mxu0 0.0
    %70 = vmatpush1.msra.mxu0 0.0
    %71 = vmatprep.subr.mxu0 0.0
    %72 = vmatpush1.msra.mxu0 0.0
    %73 = vmatprep.subr.mxu0 0.0
    %74 = vmatpush1.msra.mxu0 0.0
    %75 = vmatprep.subr.mxu0 0.0
    %76 = vmatpush1.msra.mxu0 0.0
    %77 = vmatprep.subr.mxu0 0.0
    %78 = vmatpush1.msra.mxu0 0.0
    %79 = vmatprep.subr.mxu0 0.0
    %80 = vmatpush1.msra.mxu0 0.0
    %81 = vmatprep.subr.mxu0 0.0
    %82 = vmatpush1.msra.mxu0 0.0
    %83 = vmatprep.subr.mxu0 0.0
    %84 = vmatpush1.msra.mxu0 0.0
    %85 = vmatprep.subr.mxu0 0.0
    %86 = vmatpush1.msra.mxu0 0.0
    %87 = vmatprep.subr.mxu0 0.0
    %88 = vmatpush1.msra.mxu0 0.0
    %89 = vmatprep.subr.mxu0 0.0
    %90 = vmatpush1.msra.mxu0 0.0
    %91 = vmatprep.subr.mxu0 0.0
    %92 = vmatpush1.msra.mxu0 0.0
    %93 = vmatprep.subr.mxu0 0.0
    %94 = vmatpush1.msra.mxu0 0.0
    %95 = vmatprep.subr.mxu0 0.0
    %96 = vmatpush1.msra.mxu0 0.0
    %97 = vmatprep.subr.mxu0 0.0
    %98 = vmatpush1.msra.mxu0 0.0
    %99 = vmatprep.subr.mxu0 0.0
    %100 = vmatpush1.msra.mxu0 0.0
    %101 = vmatprep.subr.mxu0 0.0
    %102 = vmatpush1.msra.mxu0 0.0
    %103 = vmatprep.subr.mxu0 0.0
    %104 = vmatpush1.msra.mxu0 0.0
    %105 = vmatprep.mubr.f32.mxu0 0.0
    %106 = vmatmul.mubr.f32.gmra.mrb[0].mxu0 %v36
    %v107 = vpop.f32.mrb[0].mxu0
    %v108 = vadd.f32 %v32, %v107
    %v109 = vpop.f32.mrb[0].mxu0
    %110 = vmatprep.mubr.f32.mxu0 0.0
    %111 = vmatmul.mubr.f32.gmra.mrb[0].mxu0 %v39
    %v112 = vpop.f32.mrb[0].mxu0
    %v113 = vadd.f32 %v32, %v112
    %v114 = vpop.f32.mrb[0].mxu0
    %115 = vdwg.mxu0
    %v116 = vxor.u32 %v108, 2147483648
    %v117 = vxor.u32 %v113, 2147483648
    %v118 = vmul.f32 %v116, 1.442695
    %v119 = vpow.pop %v118
    %v120 = vmul.f32 %v117, 1.442695
    %v121 = vpow.pop %v120
    %v122 = vadd.f32 %v119, 1.0
    %v123 = vadd.f32 %v121, 1.0
    %v124 = vrcp.pop %v122
    %v125 = vmul.f32 1.0, %v124
    %v126 = vrcp.pop %v123
    %v127 = vmul.f32 1.0, %v126
    %v128 = vmul.f32 %v108, %v125
    %v129 = vmul.f32 %v113, %v127
    %v130 = vld [vmem:[%s3] sm:$0xff]
    %v131 = vld [vmem:[%s3 + $0x8] sm:$0xff]
    %v132 = vld [vmem:[%s3 + $0x10] sm:$0xff]
    %v133 = vld [vmem:[%s3 + $0x18] sm:$0xff]
    %v134 = vld [vmem:[%s3 + $0x20] sm:$0xff]
    %v135 = vld [vmem:[%s3 + $0x28] sm:$0xff]
    %v136 = vld [vmem:[%s3 + $0x30] sm:$0xff]
    %v137 = vld [vmem:[%s3 + $0x38] sm:$0xff]
    %v138 = vld [vmem:[%s4] sm:$0x1]
    %v140 = vlaneseq
    %v141 = vshrl.u32 %v140, 7
    %v142 = vsub.s32 0, %v141
    %v143 = vrot.slane %v138, %v142
    %vm145 = vcmask 523264
    %v147 = vsel %vm145, %v128, 0
    %v150 = vsel %vm145, %v129, 0
    %152 = vmatprep.subr.mxu0 0.0
    %153 = vmatpush1.msra.mxu0 %v130
    %154 = vmatprep.subr.mxu0 0.0
    %155 = vmatpush1.msra.mxu0 %v131
    %156 = vmatprep.subr.mxu0 0.0
    %157 = vmatpush1.msra.mxu0 %v132
    %158 = vmatprep.subr.mxu0 0.0
    %159 = vmatpush1.msra.mxu0 %v133
    %160 = vmatprep.subr.mxu0 0.0
    %161 = vmatpush1.msra.mxu0 %v134
    %162 = vmatprep.subr.mxu0 0.0
    %163 = vmatpush1.msra.mxu0 %v135
    %164 = vmatprep.subr.mxu0 0.0
    %165 = vmatpush1.msra.mxu0 %v136
    %166 = vmatprep.subr.mxu0 0.0
    %167 = vmatpush1.msra.mxu0 %v137
    %168 = vmatprep.subr.mxu0 0.0
    %169 = vmatpush1.msra.mxu0 0.0
    %170 = vmatprep.subr.mxu0 0.0
    %171 = vmatpush1.msra.mxu0 0.0
    %172 = vmatprep.subr.mxu0 0.0
    %173 = vmatpush1.msra.mxu0 0.0
    %174 = vmatprep.subr.mxu0 0.0
    %175 = vmatpush1.msra.mxu0 0.0
    %176 = vmatprep.subr.mxu0 0.0
    %177 = vmatpush1.msra.mxu0 0.0
    %178 = vmatprep.subr.mxu0 0.0
    %179 = vmatpush1.msra.mxu0 0.0
    %180 = vmatprep.subr.mxu0 0.0
    %181 = vmatpush1.msra.mxu0 0.0
    %182 = vmatprep.subr.mxu0 0.0
    %183 = vmatpush1.msra.mxu0 0.0
    %184 = vmatprep.subr.mxu0 0.0
    %185 = vmatpush1.msra.mxu0 0.0
    %186 = vmatprep.subr.mxu0 0.0
    %187 = vmatpush1.msra.mxu0 0.0
    %188 = vmatprep.subr.mxu0 0.0
    %189 = vmatpush1.msra.mxu0 0.0
    %190 = vmatprep.subr.mxu0 0.0
    %191 = vmatpush1.msra.mxu0 0.0
    %192 = vmatprep.subr.mxu0 0.0
    %193 = vmatpush1.msra.mxu0 0.0
    %194 = vmatprep.subr.mxu0 0.0
    %195 = vmatpush1.msra.mxu0 0.0
    %196 = vmatprep.subr.mxu0 0.0
    %197 = vmatpush1.msra.mxu0 0.0
    %198 = vmatprep.subr.mxu0 0.0
    %199 = vmatpush1.msra.mxu0 0.0
    %200 = vmatprep.subr.mxu0 0.0
    %201 = vmatpush1.msra.mxu0 0.0
    %202 = vmatprep.subr.mxu0 0.0
    %203 = vmatpush1.msra.mxu0 0.0
    %204 = vmatprep.subr.mxu0 0.0
    %205 = vmatpush1.msra.mxu0 0.0
    %206 = vmatprep.subr.mxu0 0.0
    %207 = vmatpush1.msra.mxu0 0.0
    %208 = vmatprep.subr.mxu0 0.0
    %209 = vmatpush1.msra.mxu0 0.0
    %210 = vmatprep.subr.mxu0 0.0
    %211 = vmatpush1.msra.mxu0 0.0
    %212 = vmatprep.subr.mxu0 0.0
    %213 = vmatpush1.msra.mxu0 0.0
    %214 = vmatprep.subr.mxu0 0.0
    %215 = vmatpush1.msra.mxu0 0.0
    %216 = vmatprep.mubr.f32.mxu0 0.0
    %217 = vmatmul.mubr.f32.gmra.mrb[0].mxu0 %v147
    %v218 = vpop.f32.mrb[0].mxu0
    %v219 = vadd.f32 %v143, %v218
    %v220 = vpop.f32.mrb[0].mxu0
    %221 = vmatprep.mubr.f32.mxu0 0.0
    %222 = vmatmul.mubr.f32.gmra.mrb[0].mxu0 %v150
    %v223 = vpop.f32.mrb[0].mxu0
    %v224 = vadd.f32 %v143, %v223
    %v225 = vpop.f32.mrb[0].mxu0
    %226 = vdwg.mxu0
    %227 = vst.msk [vmem:[#allocation2] sm:$0xff] %vm34, %v219
    %228 = vst.msk [vmem:[#allocation2 + $0x8] sm:$0xff] %vm34, %v224
    // Predicated region
    $region22: #{selective_ssm.1} parent=1 // pred_check
      _
    $region23: #{selective_ssm.1} parent=1 // pred_check_branch
      %230 = sbr.rel (0) target = $region25
    $region24: #{selective_ssm.1} parent=1 // pred_region
      %s232 = ssub.s32 256, 256
      %233 = vsyncadd [#allocation3], %s232
      %s234 = sshll.u32 [#allocation2], 4
      %s235 = int_to_ptr.vmem [resolvable:$true] %s234
      %240 = dma.vmem_to_hbm [thread:$0]  %s235, 256, %s5, [#allocation3], 128, 128, 8
    $region25: #{selective_ssm.1} parent=1 // pred_fallthru
      _
    // Predicated region
    $region26: #{selective_ssm.1} parent=1 // pred_check
      _
    $region27: #{selective_ssm.1} parent=1 // pred_check_branch
      %242 = sbr.rel (0) target = $region29
    $region28: #{selective_ssm.1} parent=1 // pred_region
      %243 = dma.done [#allocation3], 256
    $region29: #{selective_ssm.1} parent=1 // pred_fallthru
      _
    %244 = vsyncpa [#allocation3], 1

</llo_original>
